<compile_context>
chip_gen: v5e
topology: v5e:2x2
jax: 0.10.0
libtpu: 0.0.40
codegen_flags: <defaults>
</compile_context>

<pallas_src>
import functools

import jax
import jax.numpy as jnp
from jax.experimental import pallas as pl
from jax.experimental.pallas import tpu as pltpu


def lfa_kernel(x_ref, w_ref, b_ref, out_ref, *, num_experts, out_channels):
    """One pixel-tile of the LFA forward, lane-dense [C, TILE_N] layout.

    x_ref:   (1, C_total, TILE_N)         concatenated expert activations
    w_ref:   ((E+1)*C_out, C_total)       fused weights (experts + logits)
    b_ref:   ((E+1)*C_out, 1)             fused biases
    out_ref: (1, C_out, TILE_N)
    """
    E, C = num_experts, out_channels
    x = x_ref[0]                                    # (C_total, TILE_N)

    # One fused MXU pass: rows [0, E*C) are the stacked expert outputs r_i,
    # rows [E*C, (E+1)*C) are the fusion-conv logits.
    y = jnp.dot(w_ref[...], x,
                preferred_element_type=jnp.float32) + b_ref[...]

    # Softmax over the channel (sublane) axis == torch softmax(dim=1).
    s = y[E * C:, :]                                # (C, TILE_N)
    s = s - jnp.max(s, axis=0, keepdims=True)
    e = jnp.exp(s)
    inv = pl.reciprocal(jnp.sum(e, axis=0, keepdims=True), approx=False)
    wsm = e * inv                                   # (C, TILE_N)

    # Expert-weighted sum: expert i is scaled by softmax channel i
    # (exact torch semantics: r[i] * w[:, i:i+1], summed over experts).
    out = y[0:C, :] * wsm[0:1, :]
    for i in range(1, E):
        out = out + y[i * C:(i + 1) * C, :] * wsm[i:i + 1, :]

    out_ref[0] = out.astype(out_ref.dtype)


def _pick_tile_n(hw, max_tile):
    """Largest legal lane-tile: full extent if it fits, else a multiple of 128
    that divides hw (full extent fallback keeps the block spec legal)."""
    if hw <= max_tile:
        return hw
    t = (max_tile // 128) * 128
    while t >= 128:
        if hw % t == 0:
            return t
        t -= 128
    return hw


def lfa_forward(inputs, lin_ws, lin_bs, conv_w, conv_b, out_channels, size,
                max_tile_n=2048):
    """LayeredFeatureAggregation forward. `inputs` are NCHW float32 arrays."""
    E = len(inputs)
    H, W = size
    B = inputs[0].shape[0]
    HW = H * W
    C_out = out_channels
    C_total = sum(int(x.shape[1]) for x in inputs)
    assert E <= C_out, "num_experts must be <= out_channels (softmax gather)"

    # ---- glue: bilinear resize + channel concat (no transposes) ----
    # TODO(synk): jax.image.resize antialiases when *down*sampling, unlike
    # torch.nn.Upsample(align_corners=False); identical for up/same-size.
    xs = [jax.image.resize(x, (x.shape[0], x.shape[1], H, W), method="bilinear")
          for x in inputs]
    x_all = jnp.concatenate(xs, axis=1).reshape(B, C_total, HW)

    # ---- glue: fuse per-expert 1x1 convs + fusion conv into one weight ----
    w_block = jax.scipy.linalg.block_diag(*lin_ws)           # (E*C_out, C_total)
    b_block = jnp.concatenate(lin_bs)                        # (E*C_out,)
    w_logit = conv_w @ w_block                               # (C_out, C_total)
    b_logit = conv_w @ b_block + conv_b                      # (C_out,)
    w_big = jnp.concatenate([w_block, w_logit], axis=0)      # ((E+1)*C_out, C_total)
    b_big = jnp.concatenate([b_block, b_logit]).reshape(-1, 1)

    # ---- tiling over the lane (pixel) axis ----
    tile_n = _pick_tile_n(HW, max_tile_n)
    grid = (B, HW // tile_n)

    out_flat = pl.pallas_call(
        functools.partial(lfa_kernel, num_experts=E, out_channels=C_out),
        out_shape=jax.ShapeDtypeStruct((B, C_out, HW), jnp.float32),
        grid=grid,
        in_specs=[
            pl.BlockSpec((1, C_total, tile_n), lambda b, t: (b, 0, t)),
            pl.BlockSpec(w_big.shape, lambda b, t: (0, 0)),
            pl.BlockSpec(b_big.shape, lambda b, t: (0, 0)),
        ],
        out_specs=pl.BlockSpec((1, C_out, tile_n), lambda b, t: (b, 0, t)),
        compiler_params=pltpu.CompilerParams(
            dimension_semantics=("parallel", "parallel")),
    )(x_all, w_big, b_big)

    # (B, C_out, H*W) -> NCHW (pure reshape, no HBM transpose pass).
    return out_flat.reshape(B, C_out, H, W)


def lfa_reference(inputs, lin_ws, lin_bs, conv_w, conv_b, size):
    """Pure-JAX reference mirroring the PyTorch forward (NCHW)."""
    H, W = size
    r = []
    for x, w, b in zip(inputs, lin_ws, lin_bs):
        xr = jax.image.resize(x, (x.shape[0], x.shape[1], H, W),
                              method="bilinear")
        r.append(jnp.einsum("bchw,oc->bohw", xr, w) + b[None, :, None, None])
    o_s = jnp.concatenate(r, axis=1)
    s = jnp.einsum("bchw,oc->bohw", o_s, conv_w) + conv_b[None, :, None, None]
    wsm = jax.nn.softmax(s, axis=1)
    out = r[0] * wsm[:, 0:1]
    for i in range(1, len(r)):
        out = out + r[i] * wsm[:, i:i + 1]
    return out


if __name__ == "__main__":
    key = jax.random.PRNGKey(0)

    # Module config (size given => resize + per-expert 1x1 convs are active).
    in_channels = [4, 8, 6]
    out_channels = 8            # num_experts (3) <= out_channels, as required
    size = (16, 16)
    B = 2
    E = len(in_channels)

    # Deterministic synthetic parameters (1x1 conv weights squeezed to 2-D).
    keys = jax.random.split(key, 2 * E + 3)
    lin_ws = [0.1 * jax.random.normal(keys[i], (out_channels, in_channels[i]),
                                      dtype=jnp.float32) for i in range(E)]
    lin_bs = [0.05 * jax.random.normal(keys[E + i], (out_channels,),
                                       dtype=jnp.float32) for i in range(E)]
    conv_w = 0.1 * jax.random.normal(keys[2 * E], (out_channels,
                                                   out_channels * E),
                                     dtype=jnp.float32)
    conv_b = 0.05 * jax.random.normal(keys[2 * E + 1], (out_channels,),
                                      dtype=jnp.float32)

    # Inputs at different spatial resolutions (decoder layer features), NCHW.
    spatial = [(8, 8), (16, 16), (4, 4)]
    in_keys = jax.random.split(keys[2 * E + 2], E)
    inputs = [jax.random.normal(in_keys[i],
                                (B, in_channels[i], *spatial[i]),
                                dtype=jnp.float32) for i in range(E)]

    out = lfa_forward(inputs, lin_ws, lin_bs, conv_w, conv_b,
                      out_channels, size)
    out = jax.block_until_ready(out)

    ref = lfa_reference(inputs, lin_ws, lin_bs, conv_w, conv_b, size)
    assert out.shape == (B, out_channels, *size)
    assert jnp.allclose(out, ref, atol=1e-4, rtol=1e-4), "mismatch vs reference"

    print("KERNEL_OK")
</pallas_src>

<mosaic_0001>
module attributes {stable_mosaic.version = 11 : i64} {
  func.func @lfa_kernel(%arg0: i32, %arg1: i32, %arg2: memref<1x18x256xf32, #tpu.memory_space<vmem>>, %arg3: memref<32x18xf32, #tpu.memory_space<vmem>>, %arg4: memref<32x1xf32, #tpu.memory_space<vmem>>, %arg5: memref<1x8x256xf32, #tpu.memory_space<vmem>>) attributes {dimension_semantics = [#tpu.dimension_semantics<parallel>, #tpu.dimension_semantics<parallel>], iteration_bounds = array<i64: 2, 1>, scalar_prefetch = 0 : i64, scratch_operands = 0 : i64, tpu.core_type = #tpu.core_type<tc>, window_params = [{transform_indices = @transform_0, window_bounds = array<i64: 1, 18, 256>}, {pipeline_mode = #tpu.pipeline_mode<synchronous>, transform_indices = @transform_1, window_bounds = array<i64: 32, 18>}, {pipeline_mode = #tpu.pipeline_mode<synchronous>, transform_indices = @transform_2, window_bounds = array<i64: 32, 1>}, {transform_indices = @transform_3, window_bounds = array<i64: 1, 8, 256>}]} {
    %c0 = arith.constant 0 : index
    %c0_0 = arith.constant 0 : index
    %c0_1 = arith.constant 0 : index
    %0 = vector.load %arg2[%c0, %c0_0, %c0_1] : memref<1x18x256xf32, #tpu.memory_space<vmem>>, vector<1x18x256xf32>
    %1 = vector.shape_cast %0 : vector<1x18x256xf32> to vector<18x256xf32>
    %c0_2 = arith.constant 0 : index
    %c0_3 = arith.constant 0 : index
    %2 = vector.load %arg3[%c0_2, %c0_3] : memref<32x18xf32, #tpu.memory_space<vmem>>, vector<32x18xf32>
    %cst = arith.constant dense<0.000000e+00> : vector<32x256xf32>
    %3 = tpu.matmul %2, %1, %cst {dimension_numbers = #tpu.dot_dimension_numbers<[1], [0], [0], [1], [0, 0, 1, 1], [], []>} : vector<32x18xf32>, vector<18x256xf32>, vector<32x256xf32> -> vector<32x256xf32>
    %c0_4 = arith.constant 0 : index
    %c0_5 = arith.constant 0 : index
    %4 = vector.load %arg4[%c0_4, %c0_5] : memref<32x1xf32, #tpu.memory_space<vmem>>, vector<32x1xf32>
    %5 = vector.broadcast %4 : vector<32x1xf32> to vector<32x256xf32>
    %6 = arith.addf %3, %5 : vector<32x256xf32>
    %7 = vector.extract_strided_slice %6 {offsets = [24, 0], sizes = [8, 256], strides = [1, 1]} : vector<32x256xf32> to vector<8x256xf32>
    %cst_6 = arith.constant dense<0xFF800000> : vector<256xf32>
    %8 = vector.multi_reduction <maximumf>, %7, %cst_6 [0] : vector<8x256xf32> to vector<256xf32>
    %9 = vector.shape_cast %8 : vector<256xf32> to vector<1x256xf32>
    %10 = vector.broadcast %9 : vector<1x256xf32> to vector<8x256xf32>
    %11 = arith.subf %7, %10 : vector<8x256xf32>
    %12 = math.exp %11 : vector<8x256xf32>
    %cst_7 = arith.constant dense<0.000000e+00> : vector<256xf32>
    %13 = vector.multi_reduction <add>, %12, %cst_7 [0] : vector<8x256xf32> to vector<256xf32>
    %14 = vector.shape_cast %13 : vector<256xf32> to vector<1x256xf32>
    %15 = tpu.reciprocal %14 : vector<1x256xf32> -> vector<1x256xf32>
    %16 = vector.broadcast %15 : vector<1x256xf32> to vector<8x256xf32>
    %17 = arith.mulf %12, %16 : vector<8x256xf32>
    %18 = vector.extract_strided_slice %6 {offsets = [0, 0], sizes = [8, 256], strides = [1, 1]} : vector<32x256xf32> to vector<8x256xf32>
    %19 = vector.extract_strided_slice %17 {offsets = [0, 0], sizes = [1, 256], strides = [1, 1]} : vector<8x256xf32> to vector<1x256xf32>
    %20 = vector.broadcast %19 : vector<1x256xf32> to vector<8x256xf32>
    %21 = arith.mulf %18, %20 : vector<8x256xf32>
    %22 = vector.extract_strided_slice %6 {offsets = [8, 0], sizes = [8, 256], strides = [1, 1]} : vector<32x256xf32> to vector<8x256xf32>
    %23 = vector.extract_strided_slice %17 {offsets = [1, 0], sizes = [1, 256], strides = [1, 1]} : vector<8x256xf32> to vector<1x256xf32>
    %24 = vector.broadcast %23 : vector<1x256xf32> to vector<8x256xf32>
    %25 = arith.mulf %22, %24 : vector<8x256xf32>
    %26 = arith.addf %21, %25 : vector<8x256xf32>
    %27 = vector.extract_strided_slice %6 {offsets = [16, 0], sizes = [8, 256], strides = [1, 1]} : vector<32x256xf32> to vector<8x256xf32>
    %28 = vector.extract_strided_slice %17 {offsets = [2, 0], sizes = [1, 256], strides = [1, 1]} : vector<8x256xf32> to vector<1x256xf32>
    %29 = vector.broadcast %28 : vector<1x256xf32> to vector<8x256xf32>
    %30 = arith.mulf %27, %29 : vector<8x256xf32>
    %31 = arith.addf %26, %30 : vector<8x256xf32>
    %c0_8 = arith.constant 0 : index
    %c0_9 = arith.constant 0 : index
    %c0_10 = arith.constant 0 : index
    %32 = vector.load %arg5[%c0_8, %c0_9, %c0_10] : memref<1x8x256xf32, #tpu.memory_space<vmem>>, vector<1x8x256xf32>
    %33 = vector.shape_cast %32 : vector<1x8x256xf32> to vector<8x256xf32>
    %34 = vector.shape_cast %31 : vector<8x256xf32> to vector<1x8x256xf32>
    tpu.vector_store %arg5[%c0_8, %c0_9, %c0_10], %34 {strides = array<i32>} : memref<1x8x256xf32, #tpu.memory_space<vmem>>, vector<1x8x256xf32>,
    return
  }
  func.func @transform_0(%arg0: i32, %arg1: i32) -> (i32, i32, i32) {
    %c0_i32 = arith.constant 0 : i32
    %c0_i32_0 = arith.constant 0 : i32
    return %arg0, %c0_i32, %arg1 : i32, i32, i32
  }
  func.func @transform_1(%arg0: i32, %arg1: i32) -> (i32, i32) {
    %c0_i32 = arith.constant 0 : i32
    %c0_i32_0 = arith.constant 0 : i32
    %c0_i32_1 = arith.constant 0 : i32
    return %c0_i32, %c0_i32_0 : i32, i32
  }
  func.func @transform_2(%arg0: i32, %arg1: i32) -> (i32, i32) {
    %c0_i32 = arith.constant 0 : i32
    %c0_i32_0 = arith.constant 0 : i32
    %c0_i32_1 = arith.constant 0 : i32
    return %c0_i32, %c0_i32_0 : i32, i32
  }
  func.func @transform_3(%arg0: i32, %arg1: i32) -> (i32, i32, i32) {
    %c0_i32 = arith.constant 0 : i32
    %c0_i32_0 = arith.constant 0 : i32
    return %arg0, %c0_i32, %arg1 : i32, i32, i32
  }
}

</mosaic_0001>

<llo_original>
// kernel: tpu_custom_call.1
$region0: #{tpu_custom_call.1}
  #allocation0 [shape = 'u32[]', space=smem, size = 0x4, offset = 0x4, fixed_abs, tag = 'smem constant byte address 0x4 - core index']
  #allocation1 [shape = 'u32[72,128]{1,0:T(1,128)}', space=vmem, size = 0x9000, scoped, tag = 'internal scratch']
  %s0 = inlined_call_operand.vmem [shape: f32[2,18,256], index: 0, kind: input, shape index: {}]
  %s1 = inlined_call_operand.vmem [shape: f32[32,18], index: 1, kind: input, shape index: {}]
  %s2 = inlined_call_operand.vmem [shape: f32[32,1], index: 2, kind: input, shape index: {}]
  %s3 = inlined_call_operand.hbm [shape: f32[2,8,256], index: 3, kind: output, shape index: {}]
  %s4 = sld [smem:[#allocation0]]
  $region45: #{tpu_custom_call.1} parent=0
    _
  %s6 = ssub.s32 1, %s4
  %s7 = scalar_select 0, %s6, %s4
  $region1: #{tpu_custom_call.1} parent=0
    #allocation2 [shape = 'u8[16384]{0}', space=vmem, size = 0x4000, scoped, tag = 'output window, operand 0']
    #allocation3 [shape = 's32[2]{0}', space=sflag, size = 0x8, scoped, tag = 'scoped memory for tpu_custom_call.1']
    %8 = vsyncpa [#allocation3], 0
    %s9 = scalar_lea.sflag [#allocation3], 1
    %10 = vsyncpa %s9, 0
    loop: start=0, step=1, limit=4
    $region2: #{tpu_custom_call.1} parent=1 // loop_pre_header
      _
    $region3: #{tpu_custom_call.1} parent=1 // loop_header
      %s12 = sphi 0, %s16
      %p13 = scmp.ge.s32.totalorder %s12, 4
      %s19 = sphi 0, %s31
      %s20 = sphi 0, %s27
      %s21 = sphi 0, %s19
      %s22 = sphi 0, %s20
      %s23 = sphi 0, %s21
      %s24 = sphi 0, %s22
      %s36 = sphi 0, %s38
      %s39 = sphi 0, %s36
      %s40 = sphi 0, %s39
      %s56 = sphi 0, %s40
      %s60 = sphi 0, %s60
      %s62 = sphi 0, %s60
      %s63 = sphi 0, %s62
      %s77 = sphi 0, %s63
      %s81 = sphi 0, %s81
      %s83 = sphi 0, %s81
      %s84 = sphi 0, %s83
      %s98 = sphi 0, %s84
      %s106 = sphi 0, %s108
      %s109 = sphi 0, %s106
      %s110 = sphi 0, %s109
      %s126 = sphi 0, %s110
    $region4: #{tpu_custom_call.1} parent=1 // loop_header_branch
      %15 = sbr.rel (%p13) target = $region8
    $region5: #{tpu_custom_call.1} parent=1 // loop_body
      %s17 = ssub.s32 %s12, 1
      %s18 = ssub.s32 %s12, 2
      %s25 = sadd.s32 1, %s20
      %p26 = scmp.ge.s32.totalorder %s25, 1
      %s27 = scalar_select %p26, 0, %s25
      %s28 = sadd.s32 1, %s19
      %s29 = scalar_select %p26, %s28, %s19
      %p30 = scmp.ge.s32.totalorder %s29, 2
      %s31 = scalar_select %p30, 0, %s29
      %s32 = ssub.s32 %s19, %s31
      %s33 = ssub.s32 %s20, %s27
      %s34 = sor.u32 %s32, %s33
      %p35 = scmp.eq.s32.totalorder %s34, 0
      %s37 = sadd.s32 %s36, 1
      %s38 = scalar_select %p35, %s36, %s37
      %p41 = pneg %p35
      %p42 = scmp.eq.s32.totalorder %s12, 1
      %p43 = por %p41, %p42
      %p44 = scmp.ne.s32.totalorder %s36, %s39
      %p45 = scmp.eq.s32.totalorder %s12, 0
      %p46 = por %p44, %p45
      %p47 = scmp.ne.s32.totalorder %s36, %s39
      %p48 = scmp.eq.s32.totalorder %s17, 1
      %p49 = por %p47, %p48
      %p50 = scmp.ne.s32.totalorder %s39, %s40
      %p51 = scmp.eq.s32.totalorder %s17, 0
      %p52 = por %p50, %p51
      %p53 = scmp.ne.s32.totalorder %s39, %s40
      %p54 = scmp.eq.s32.totalorder %s18, 1
      %p55 = por %p53, %p54
      %p57 = scmp.ne.s32.totalorder %s40, %s56
      %p58 = scmp.eq.s32.totalorder %s18, 0
      %p59 = por %p57, %p58
      %s61 = sadd.s32 %s60, 1
      %p64 = scmp.eq.s32.totalorder %s12, 1
      %p65 = scmp.ne.s32.totalorder %s60, %s62
      %p66 = scmp.eq.s32.totalorder %s12, 0
      %p67 = por %p65, %p66
      %p68 = scmp.ne.s32.totalorder %s60, %s62
      %p69 = scmp.eq.s32.totalorder %s17, 1
      %p70 = por %p68, %p69
      %p71 = scmp.ne.s32.totalorder %s62, %s63
      %p72 = scmp.eq.s32.totalorder %s17, 0
      %p73 = por %p71, %p72
      %p74 = scmp.ne.s32.totalorder %s62, %s63
      %p75 = scmp.eq.s32.totalorder %s18, 1
      %p76 = por %p74, %p75
      %p78 = scmp.ne.s32.totalorder %s63, %s77
      %p79 = scmp.eq.s32.totalorder %s18, 0
      %p80 = por %p78, %p79
      %s82 = sadd.s32 %s81, 1
      %p85 = scmp.eq.s32.totalorder %s12, 1
      %p86 = scmp.ne.s32.totalorder %s81, %s83
      %p87 = scmp.eq.s32.totalorder %s12, 0
      %p88 = por %p86, %p87
      %p89 = scmp.ne.s32.totalorder %s81, %s83
      %p90 = scmp.eq.s32.totalorder %s17, 1
      %p91 = por %p89, %p90
      %p92 = scmp.ne.s32.totalorder %s83, %s84
      %p93 = scmp.eq.s32.totalorder %s17, 0
      %p94 = por %p92, %p93
      %p95 = scmp.ne.s32.totalorder %s83, %s84
      %p96 = scmp.eq.s32.totalorder %s18, 1
      %p97 = por %p95, %p96
      %p99 = scmp.ne.s32.totalorder %s84, %s98
      %p100 = scmp.eq.s32.totalorder %s18, 0
      %p101 = por %p99, %p100
      %s102 = ssub.s32 %s19, %s31
      %s103 = ssub.s32 %s20, %s27
      %s104 = sor.u32 %s102, %s103
      %p105 = scmp.eq.s32.totalorder %s104, 0
      %s107 = sadd.s32 %s106, 1
      %s108 = scalar_select %p105, %s106, %s107
      %p111 = pneg %p105
      %p112 = scmp.eq.s32.totalorder %s12, 1
      %p113 = por %p111, %p112
      %p114 = scmp.ne.s32.totalorder %s106, %s109
      %p115 = scmp.eq.s32.totalorder %s12, 0
      %p116 = por %p114, %p115
      %p117 = scmp.ne.s32.totalorder %s106, %s109
      %p118 = scmp.eq.s32.totalorder %s17, 1
      %p119 = por %p117, %p118
      %p120 = scmp.ne.s32.totalorder %s109, %s110
      %p121 = scmp.eq.s32.totalorder %s17, 0
      %p122 = por %p120, %p121
      %p123 = scmp.ne.s32.totalorder %s109, %s110
      %p124 = scmp.eq.s32.totalorder %s18, 1
      %p125 = por %p123, %p124
      %p127 = scmp.ne.s32.totalorder %s110, %s126
      %p128 = scmp.eq.s32.totalorder %s18, 0
      %p129 = por %p127, %p128
      %p130 = scmp.le.s32.totalorder 1, %s12
      %p131 = scmp.lt.s32.totalorder %s12, 3
      %p132 = pnand %p130, %p131
      %p133 = pneg %p132
      // Predicated region
      $region9: #{tpu_custom_call.1} parent=5 // pred_check
        _
      $region10: #{tpu_custom_call.1} parent=5 // pred_check_branch
        %135 = sbr.rel (%p132) target = $region12
      $region11: #{tpu_custom_call.1} parent=5 // pred_region
        %s136 = ssub.s32 %s12, 1
        // Predicated region
        $region13: #{tpu_custom_call.1} parent=11 // pred_check
          %p137 = pneg %p73
        $region14: #{tpu_custom_call.1} parent=11 // pred_check_branch
          %139 = sbr.rel (%p137) target = $region16
        $region15: #{tpu_custom_call.1} parent=11 // pred_region
          _
        $region16: #{tpu_custom_call.1} parent=11 // pred_fallthru
          _
        // Predicated region
        $region17: #{tpu_custom_call.1} parent=11 // pred_check
          %p140 = pneg %p94
        $region18: #{tpu_custom_call.1} parent=11 // pred_check_branch
          %142 = sbr.rel (%p140) target = $region20
        $region19: #{tpu_custom_call.1} parent=11 // pred_region
          _
        $region20: #{tpu_custom_call.1} parent=11 // pred_fallthru
          _
      $region12: #{tpu_custom_call.1} parent=5 // pred_fallthru
        _
      %p143 = scmp.lt.s32.totalorder %s12, 2
      // Predicated region
      $region21: #{tpu_custom_call.1} parent=5 // pred_check
        %p144 = pneg %p143
      $region22: #{tpu_custom_call.1} parent=5 // pred_check_branch
        %146 = sbr.rel (%p144) target = $region24
      $region23: #{tpu_custom_call.1} parent=5 // pred_region
        // Predicated region
        $region25: #{tpu_custom_call.1} parent=23 // pred_check
          %p147 = pneg %p46
        $region26: #{tpu_custom_call.1} parent=23 // pred_check_branch
          %149 = sbr.rel (%p147) target = $region28
        $region27: #{tpu_custom_call.1} parent=23 // pred_region
          %s150 = smul.u32 2, %s20
          %p151 = scmp.lt.s32.totalorder %s19, 1
          %s152 = scalar_select %p151, %s19, 1
          %p153 = scmp.lt.s32.totalorder %s150, 1
          %s154 = scalar_select %p153, %s150, 1
          %s155 = smul.addr %s152, 6
          %s156 = sadd.s32 %s154, %s155
          %s157 = smul.addr %s156, 8
          %s158 = scalar_lea.vmem %s0, %s157
          %s159 = smul.u32 2, %s20
        $region28: #{tpu_custom_call.1} parent=23 // pred_fallthru
          _
      $region24: #{tpu_custom_call.1} parent=5 // pred_fallthru
        _
      %p160 = scmp.le.s32.totalorder 1, %s12
      %p161 = scmp.lt.s32.totalorder %s12, 3
      %p162 = pnand %p160, %p161
      %p163 = pneg %p162
      // Predicated region
      $region29: #{tpu_custom_call.1} parent=5 // pred_check
        _
      $region30: #{tpu_custom_call.1} parent=5 // pred_check_branch
        %165 = sbr.rel (%p162) target = $region32
      $region31: #{tpu_custom_call.1} parent=5 // pred_region
        %s166 = ssub.s32 %s12, 1
        %s167 = smul.u32 2, %s22
        %p168 = scmp.lt.s32.totalorder %s21, 1
        %s169 = scalar_select %p168, %s21, 1
        %p170 = scmp.lt.s32.totalorder %s167, 1
        %s171 = scalar_select %p170, %s167, 1
        %s172 = smul.addr %s169, 6
        %s173 = sadd.s32 %s171, %s172
        %s174 = smul.addr %s173, 8
        %s175 = scalar_lea.vmem %s0, %s174
        %p176 = pneg %p52
        %p177 = pneg %p49
        %p178 = pneg %p73
        %p179 = pneg %p70
        %p180 = pneg %p94
        %p181 = pneg %p91
        %p182 = pneg %p122
        %p183 = pneg %p119
        %s184 = sand.u32 %s109, 1
        %s185 = scalar_lea.sflag [#allocation3], %s184
        %s186 = sand.u32 %s109, 1
        %s187 = smul.addr %s186, 16
        %s188 = scalar_lea.vmem [#allocation2], %s187
        %s189 = smul.u32 2, %s22
        %p190 = scmp.lt.s32.totalorder %s21, 1
        %s191 = scalar_select %p190, %s21, 1
        %p192 = scmp.lt.s32.totalorder %s189, 1
        %s193 = scalar_select %p192, %s189, 1
        %s194 = smul.addr %s191, 6
        %s195 = sadd.s32 %s193, %s194
        %s196 = smul.addr %s195, 8
        %s197 = scalar_lea.vmem %s0, %s196
        %s198 = smul.u32 2, %s22
        %s199 = smul.u32 2, %s22
        %v200 = vld [vmem:[%s197] sm:$0xff]
        %v201 = vld [vmem:[%s197 + $0x8] sm:$0xff]
        %v202 = vld [vmem:[%s197 + $0x10] sm:$0xff]
        %v203 = vld [vmem:[%s197 + $0x18] sm:$0xff]
        %v204 = vld [vmem:[%s197 + $0x20] sm:$0x3]
        %v205 = vld [vmem:[%s197 + $0x28] sm:$0x3]
        %v206 = vld [vmem:[%s1] sm:$0xff]
        %v207 = vld [vmem:[%s1 + $0x8] sm:$0xff]
        %v208 = vld [vmem:[%s1 + $0x10] sm:$0xff]
        %v209 = vld [vmem:[%s1 + $0x18] sm:$0xff]
        %v210 = vld [vmem:[%s2] sm:$0xff]
        %v211 = vld [vmem:[%s2 + $0x8] sm:$0xff]
        %v212 = vld [vmem:[%s2 + $0x10] sm:$0xff]
        %v213 = vld [vmem:[%s2 + $0x18] sm:$0xff]
        %215 = vset.pattern.permute.xlu0 0
        %216 = vperm.xlu0 %215, %v210
        %v217 = vpop.permute.xlu0 %216
        %220 = vset.pattern.permute.xlu0 0
        %221 = vperm.xlu0 %220, %v211
        %v222 = vpop.permute.xlu0 %221
        %225 = vset.pattern.permute.xlu0 0
        %226 = vperm.xlu0 %225, %v212
        %v227 = vpop.permute.xlu0 %226
        %230 = vset.pattern.permute.xlu0 0
        %231 = vperm.xlu0 %230, %v213
        %v232 = vpop.permute.xlu0 %231
        %vm234 = vcmask 146432
        %v236 = vsel %vm234, %v206, 0
        %v239 = vsel %vm234, %v207, 0
        %v242 = vsel %vm234, %v208, 0
        %v245 = vsel %vm234, %v209, 0
        %vm247 = vcmask 1041408
        %v249 = vsel %vm247, %v204, 0
        %v252 = vsel %vm247, %v205, 0
        %254 = vmatpush.msra.mxu0 0.0
        %255 = vmatpush.msra.mxu0 0.0
        %256 = vmatpush.msra.mxu0 0.0
        %257 = vmatpush.msra.mxu0 0.0
        %258 = vmatpush.msra.mxu0 0.0
        %259 = vmatpush.msra.mxu0 0.0
        %260 = vmatpush.msra.mxu0 0.0
        %261 = vmatpush.msra.mxu0 0.0
        %262 = vmatpush.msra.mxu0 0.0
        %263 = vmatpush.msra.mxu0 0.0
        %264 = vmatpush.msra.mxu0 0.0
        %265 = vmatpush.msra.mxu0 0.0
        %266 = vmatpush.msra.mxu0 0.0
        %267 = vmatpush.msra.mxu0 %v249
        %268 = vmatpush.msra.mxu0 %v202
        %269 = vmatpush.msra.mxu0 %v200
        %270 = vmatmul.f32.gmra.mxu0 %v236
        %v271 = vpop.f32.mrf.mxu0
        %v272 = vadd.f32 %v217, %v271
        %273 = vmatmul.f32.gmra.mxu0 %v239
        %v274 = vpop.f32.mrf.mxu0
        %v275 = vadd.f32 %v222, %v274
        %276 = vmatmul.f32.gmra.mxu0 %v242
        %v277 = vpop.f32.mrf.mxu0
        %v278 = vadd.f32 %v227, %v277
        %279 = vmatmul.f32.gmra.mxu0 %v245
        %v280 = vpop.f32.mrf.mxu0
        %v281 = vadd.f32 %v232, %v280
        %282 = vdwg.mxu0
        %283 = vmatpush.msra.mxu0 0.0
        %284 = vmatpush.msra.mxu0 0.0
        %285 = vmatpush.msra.mxu0 0.0
        %286 = vmatpush.msra.mxu0 0.0
        %287 = vmatpush.msra.mxu0 0.0
        %288 = vmatpush.msra.mxu0 0.0
        %289 = vmatpush.msra.mxu0 0.0
        %290 = vmatpush.msra.mxu0 0.0
        %291 = vmatpush.msra.mxu0 0.0
        %292 = vmatpush.msra.mxu0 0.0
        %293 = vmatpush.msra.mxu0 0.0
        %294 = vmatpush.msra.mxu0 0.0
        %295 = vmatpush.msra.mxu0 0.0
        %296 = vmatpush.msra.mxu0 %v252
        %297 = vmatpush.msra.mxu0 %v203
        %298 = vmatpush.msra.mxu0 %v201
        %299 = vmatmul.f32.gmra.mxu0 %v236
        %v300 = vpop.f32.mrf.mxu0
        %v301 = vadd.f32 %v217, %v300
        %302 = vmatmul.f32.gmra.mxu0 %v239
        %v303 = vpop.f32.mrf.mxu0
        %v304 = vadd.f32 %v222, %v303
        %305 = vmatmul.f32.gmra.mxu0 %v242
        %v306 = vpop.f32.mrf.mxu0
        %v307 = vadd.f32 %v227, %v306
        %308 = vmatmul.f32.gmra.mxu0 %v245
        %v309 = vpop.f32.mrf.mxu0
        %v310 = vadd.f32 %v232, %v309
        %311 = vdwg.mxu0
        %v312 = vrot.slane %v281, 4
        %v313 = vmax.f32 %v281, %v312
        %v314 = vrot.slane %v313, 2
        %v315 = vmax.f32 %v313, %v314
        %v316 = vrot.slane %v315, 1
        %v317 = vmax.f32 %v315, %v316
        %v318 = vrot.slane %v310, 4
        %v319 = vmax.f32 %v310, %v318
        %v320 = vrot.slane %v319, 2
        %v321 = vmax.f32 %v319, %v320
        %v322 = vrot.slane %v321, 1
        %v323 = vmax.f32 %v321, %v322
        %v324 = vsub.f32 %v281, %v317
        %v325 = vsub.f32 %v310, %v323
        %v326 = vmul.f32 %v324, 1.442695
        %v327 = vpow.pop %v326
        %v328 = vmul.f32 %v325, 1.442695
        %v329 = vpow.pop %v328
        %v330 = vrot.slane %v327, 4
        %v331 = vadd.f32 %v327, %v330
        %v332 = vrot.slane %v331, 2
        %v333 = vadd.f32 %v331, %v332
        %v334 = vrot.slane %v333, 1
        %v335 = vadd.f32 %v333, %v334
        %v336 = vrot.slane %v329, 4
        %v337 = vadd.f32 %v329, %v336
        %v338 = vrot.slane %v337, 2
        %v339 = vadd.f32 %v337, %v338
        %v340 = vrot.slane %v339, 1
        %v341 = vadd.f32 %v339, %v340
        %v342 = vrcp.pop %v335
        %v343 = vmul.f32 %v335, %v342
        %v344 = vsub.f32 1.0, %v343
        %v345 = vmul.f32 %v342, %v344
        %v346 = vadd.f32 %v342, %v345
        %vm347 = vweird.f32 %v335
        %vm348 = vweird.f32 %v342
        %vm349 = vmor %vm347, %vm348
        %v350 = vsel %vm349, %v342, %v346
        %v351 = vand.u32 2147483647, %v335
        %vm352 = vcmp.eq.f32.partialorder %v351, 8.507059e+37
        %v353 = vand.u32 %v335, 2147483648
        %v354 = vor.u32 1.1754944e-38, %v353
        %v355 = vsel %vm352, %v354, %v350
        %v356 = vrcp.pop %v341
        %v357 = vmul.f32 %v341, %v356
        %v358 = vsub.f32 1.0, %v357
        %v359 = vmul.f32 %v356, %v358
        %v360 = vadd.f32 %v356, %v359
        %vm361 = vweird.f32 %v341
        %vm362 = vweird.f32 %v356
        %vm363 = vmor %vm361, %vm362
        %v364 = vsel %vm363, %v356, %v360
        %v365 = vand.u32 2147483647, %v341
        %vm366 = vcmp.eq.f32.partialorder %v365, 8.507059e+37
        %v367 = vand.u32 %v341, 2147483648
        %v368 = vor.u32 1.1754944e-38, %v367
        %v369 = vsel %vm366, %v368, %v364
        %v370 = vmul.f32 %v327, %v355
        %v371 = vmul.f32 %v329, %v369
        %v372 = vperm.slane %v370, 0
        %v373 = vperm.slane %v371, 0
        %v374 = vmul.f32 %v272, %v372
        %v375 = vmul.f32 %v301, %v373
        %v376 = vperm.slane %v370, 1
        %v377 = vperm.slane %v371, 1
        %v378 = vmul.f32 %v275, %v376
        %v379 = vmul.f32 %v304, %v377
        %v380 = vadd.f32 %v374, %v378
        %v381 = vadd.f32 %v375, %v379
        %v382 = vperm.slane %v370, 2
        %v383 = vperm.slane %v371, 2
        %v384 = vmul.f32 %v278, %v382
        %v385 = vmul.f32 %v307, %v383
        %v386 = vadd.f32 %v380, %v384
        %v387 = vadd.f32 %v381, %v385
        %388 = vst [vmem:[%s188] sm:$0xff] %v386
        %389 = vst [vmem:[%s188 + $0x8] sm:$0xff] %v387
        %s390 = sand.u32 %s109, 1
        %s391 = scalar_lea.sflag [#allocation3], %s390
        %s392 = sand.u32 %s109, 1
        %s393 = smul.addr %s392, 16
        %s394 = scalar_lea.vmem [#allocation2], %s393
        // Predicated region
        $region33: #{tpu_custom_call.1} parent=31 // pred_check
          %p395 = pneg %p119
        $region34: #{tpu_custom_call.1} parent=31 // pred_check_branch
          %397 = sbr.rel (%p395) target = $region36
        $region35: #{tpu_custom_call.1} parent=31 // pred_region
          %s398 = smul.u32 2, %s22
          %400 = vsyncadd %s391, 0
          %s401 = smul.addr %s21, 2
          %s402 = sadd.s32 %s398, %s401
          %s403 = smul.addr %s402, 8
          %s404 = scalar_lea.hbm %s3, %s403
          %s406 = sshll.u32 %s394, 4
          %s407 = int_to_ptr.vmem [resolvable:$true] %s406
          %s408 = sshll.u32 %s404, 4
          %s409 = int_to_ptr.hbm [resolvable:$true] %s408
          %411 = dma.vmem_to_hbm [thread:$0]  %s407, 256, %s409, %s391
        $region36: #{tpu_custom_call.1} parent=31 // pred_fallthru
          _
      $region32: #{tpu_custom_call.1} parent=5 // pred_fallthru
        _
      %p412 = scmp.le.s32.totalorder 2, %s12
      // Predicated region
      $region37: #{tpu_custom_call.1} parent=5 // pred_check
        %p413 = pneg %p412
      $region38: #{tpu_custom_call.1} parent=5 // pred_check_branch
        %415 = sbr.rel (%p413) target = $region40
      $region39: #{tpu_custom_call.1} parent=5 // pred_region
        %s416 = ssub.s32 %s12, 2
        // Predicated region
        $region41: #{tpu_custom_call.1} parent=39 // pred_check
          %p417 = pneg %p125
        $region42: #{tpu_custom_call.1} parent=39 // pred_check_branch
          %419 = sbr.rel (%p417) target = $region44
        $region43: #{tpu_custom_call.1} parent=39 // pred_region
          %s420 = sand.u32 %s110, 1
          %s421 = scalar_lea.sflag [#allocation3], %s420
          %s422 = sand.u32 %s110, 1
          %s423 = smul.addr %s422, 16
          %s424 = scalar_lea.vmem [#allocation2], %s423
          %426 = dma.done %s421, 256
        $region44: #{tpu_custom_call.1} parent=39 // pred_fallthru
          _
      $region40: #{tpu_custom_call.1} parent=5 // pred_fallthru
        _
    $region6: #{tpu_custom_call.1} parent=1 // loop_footer
      %s16 = sadd.s32 1, %s12
    $region7: #{tpu_custom_call.1} parent=1 // loop_footer_branch
      %11 = sbr.rel target = $region3
    $region8: #{tpu_custom_call.1} parent=1 // loop_exit
      _
    %427 = vsyncpa [#allocation3], 1
    %s428 = scalar_lea.sflag [#allocation3], 1
    %429 = vsyncpa %s428, 1

</llo_original>
